<compile_context>
chip_gen: v7x
topology: tpu7x:2x2x1
jax: 0.10.0
libtpu: 0.0.40
codegen_flags: <defaults>
</compile_context>

<pallas_src>
import jax
import jax.numpy as jnp
from jax.experimental import pallas as pl
from jax.experimental.pallas import tpu as pltpu

IN_FEATURES = 128 * 128          # batch_size * config.embed = 16384
NUM_CLASSES = 1                  # config.num_classes


def _tgcn_kernel(x_ref, w_ref, b_ref, o_ref):
    """out = sigmoid(x @ W^T + b) in a single step.

    x_ref: (B, F)  VMEM
    w_ref: (C, F)  VMEM, lane-dense weight row(s)   (C == 1)
    b_ref: (1, C)  SMEM scalar bias
    o_ref: (B, C)  VMEM output
    """
    # VPU elementwise multiply with sublane broadcast of the (1, F) weight row,
    # then XLU cross-lane reduction over the feature axis.
    prod = x_ref[...] * w_ref[...]                       # (B, F) f32
    logits = jnp.sum(prod, axis=-1, keepdims=True)       # (B, 1) f32
    logits = logits + b_ref[0, 0]                        # SMEM scalar bias
    o_ref[...] = jax.nn.sigmoid(logits).astype(o_ref.dtype)


@jax.jit
def tgcn_forward(x, w_row, b):
    """x: (B, F) f32, w_row: (C, F) f32 (PyTorch layout), b: (1, C) f32 -> (B, C)."""
    batch, feat = x.shape
    n_cls, feat_w = w_row.shape
    assert feat == feat_w

    return pl.pallas_call(
        _tgcn_kernel,
        out_shape=jax.ShapeDtypeStruct((batch, n_cls), x.dtype),
        grid_spec=pltpu.PrefetchScalarGridSpec(
            num_scalar_prefetch=0,
            grid=(1,),                                      # single step: no K tiling
            in_specs=[
                pl.BlockSpec((batch, feat), lambda i: (0, 0)),   # x, full block
                pl.BlockSpec((n_cls, feat), lambda i: (0, 0)),   # W row, lane-dense
                pl.BlockSpec(memory_space=pltpu.MemorySpace.SMEM),  # bias scalar
            ],
            out_specs=pl.BlockSpec((batch, n_cls), lambda i: (0, 0)),
        ),
        compiler_params=pltpu.CompilerParams(
            dimension_semantics=("arbitrary",),
        ),
    )(x, w_row, b)


def reference_forward(x, w_row, b):
    return jax.nn.sigmoid(x @ w_row.T + b)


if __name__ == "__main__":
    key = jax.random.PRNGKey(0)
    kx, kw, kb = jax.random.split(key, 3)

    # Small example batch; feature dim is fixed by the module's Linear layer.
    B = 4
    x = jax.random.normal(kx, (B, IN_FEATURES), dtype=jnp.float32)

    # Deterministic PyTorch-style init: U(-1/sqrt(in), +1/sqrt(in)).
    # Weight stored in PyTorch's native (out_features, in_features) layout,
    # which is already lane-dense for the kernel.
    bound = 1.0 / jnp.sqrt(jnp.float32(IN_FEATURES))
    w = jax.random.uniform(
        kw, (NUM_CLASSES, IN_FEATURES), minval=-bound, maxval=bound,
        dtype=jnp.float32)
    b = jax.random.uniform(
        kb, (1, NUM_CLASSES), minval=-bound, maxval=bound, dtype=jnp.float32)

    out = tgcn_forward(x, w, b)
    out = jax.block_until_ready(out)

    ref = reference_forward(x, w, b)
    assert out.shape == (B, NUM_CLASSES)
    assert jnp.allclose(out, ref, atol=1e-5, rtol=1e-5), (out, ref)

    # TODO(synk): the original forward moves the tensor to CPU (`.to('cpu')`);
    # that device placement has no kernel-level equivalent and is ignored.
    print("KERNEL_OK")
</pallas_src>

<mosaic_0001>
module attributes {stable_mosaic.version = 11 : i64} {
  func.func @_tgcn_kernel(%arg0: i32, %arg1: memref<4x16384xf32, #tpu.memory_space<vmem>>, %arg2: memref<1x16384xf32, #tpu.memory_space<vmem>>, %arg3: memref<1x1xf32, #tpu.memory_space<smem>>, %arg4: memref<4x1xf32, #tpu.memory_space<vmem>>) attributes {dimension_semantics = [#tpu.dimension_semantics<arbitrary>], iteration_bounds = array<i64: 1>, scalar_prefetch = 0 : i64, scratch_operands = 0 : i64, tpu.core_type = #tpu.core_type<tc>, window_params = [{pipeline_mode = #tpu.pipeline_mode<synchronous>, transform_indices = @transform_0, window_bounds = array<i64: 4, 16384>}, {pipeline_mode = #tpu.pipeline_mode<synchronous>, transform_indices = @transform_1, window_bounds = array<i64: 1, 16384>}, {transform_indices = @transform_2, window_bounds = array<i64: 1, 1>}, {pipeline_mode = #tpu.pipeline_mode<synchronous>, transform_indices = @transform_3, window_bounds = array<i64: 4, 1>}]} {
    %c0 = arith.constant 0 : index
    %c0_0 = arith.constant 0 : index
    %0 = vector.load %arg1[%c0, %c0_0] : memref<4x16384xf32, #tpu.memory_space<vmem>>, vector<4x16384xf32>
    %c0_1 = arith.constant 0 : index
    %c0_2 = arith.constant 0 : index
    %1 = vector.load %arg2[%c0_1, %c0_2] : memref<1x16384xf32, #tpu.memory_space<vmem>>, vector<1x16384xf32>
    %2 = vector.broadcast %1 : vector<1x16384xf32> to vector<4x16384xf32>
    %3 = arith.mulf %0, %2 : vector<4x16384xf32>
    %cst = arith.constant dense<0.000000e+00> : vector<4xf32>
    %4 = vector.multi_reduction <add>, %3, %cst [1] : vector<4x16384xf32> to vector<4xf32>
    %5 = vector.shape_cast %4 : vector<4xf32> to vector<4x1xf32>
    %c0_3 = arith.constant 0 : index
    %c0_4 = arith.constant 0 : index
    %6 = memref.load %arg3[%c0_3, %c0_4] : memref<1x1xf32, #tpu.memory_space<smem>>
    %7 = vector.broadcast %6 : f32 to vector<4x1xf32>
    %8 = arith.addf %5, %7 : vector<4x1xf32>
    %9 = arith.negf %8 : vector<4x1xf32>
    %10 = math.exp %9 : vector<4x1xf32>
    %cst_5 = arith.constant 1.000000e+00 : f32
    %11 = vector.broadcast %cst_5 : f32 to vector<4x1xf32>
    %12 = arith.addf %11, %10 : vector<4x1xf32>
    %13 = arith.divf %11, %12 : vector<4x1xf32>
    %c0_6 = arith.constant 0 : index
    %c0_7 = arith.constant 0 : index
    %14 = vector.load %arg4[%c0_6, %c0_7] : memref<4x1xf32, #tpu.memory_space<vmem>>, vector<4x1xf32>
    tpu.vector_store %arg4[%c0_6, %c0_7], %13 {strides = array<i32>} : memref<4x1xf32, #tpu.memory_space<vmem>>, vector<4x1xf32>,
    return
  }
  func.func @transform_0(%arg0: i32) -> (i32, i32) {
    %c0_i32 = arith.constant 0 : i32
    %c0_i32_0 = arith.constant 0 : i32
    %c0_i32_1 = arith.constant 0 : i32
    return %c0_i32, %c0_i32_0 : i32, i32
  }
  func.func @transform_1(%arg0: i32) -> (i32, i32) {
    %c0_i32 = arith.constant 0 : i32
    %c0_i32_0 = arith.constant 0 : i32
    %c0_i32_1 = arith.constant 0 : i32
    return %c0_i32, %c0_i32_0 : i32, i32
  }
  func.func @transform_2(%arg0: i32) -> (i32, i32) {
    %c0_i32 = arith.constant 0 : i32
    %c0_i32_0 = arith.constant 0 : i32
    %c0_i32_1 = arith.constant 0 : i32
    return %c0_i32, %c0_i32_0 : i32, i32
  }
  func.func @transform_3(%arg0: i32) -> (i32, i32) {
    %c0_i32 = arith.constant 0 : i32
    %c0_i32_0 = arith.constant 0 : i32
    %c0_i32_1 = arith.constant 0 : i32
    return %c0_i32, %c0_i32_0 : i32, i32
  }
}

</mosaic_0001>

<llo_original>
// kernel: tgcn_forward.1
$region0: #{tgcn_forward.1}
  #allocation0 [shape = 'u32[]', space=smem, size = 0x4, offset = 0x4, fixed_abs, tag = 'smem constant byte address 0x4 - core index']
  #allocation1 [shape = 'u32[144,128]{1,0:T(1,128)}', space=vmem, size = 0x12000, scoped, tag = 'internal scratch']
  #allocation2 [shape = 'f32[1,1]{1,0:T(1,128)S(6)}', space=smem, size = 0x200, scoped, tag = 'scoped memory for tgcn_forward.1']
  %s0 = inlined_call_operand.hbm [shape: f32[4,16384], index: 0, kind: input, shape index: {}]
  %s1 = inlined_call_operand.hbm [shape: f32[1,16384], index: 1, kind: input, shape index: {}]
  %s2 = inlined_call_operand.<no memory space> [shape: f32[1,1], index: 2, kind: input, shape index: {}]
  %s3 = inlined_call_operand.vmem [shape: f32[4,1], index: 3, kind: output, shape index: {}]
  %s4 = sld [smem:[#allocation0]]
  $region30: #{tgcn_forward.1} parent=0
    _
  %s6 = ssub.s32 1, %s4
  %s7 = scalar_select 0, %s6, %s4
  %8 = sst [smem:[#allocation2]] %s2
  $region1: #{tgcn_forward.1} parent=0
    #allocation3 [shape = 'u8[262144]{0}', space=vmem, size = 0x40000, scoped, tag = 'input window, operand 0, single buffered']
    #allocation4 [shape = 's32[1]{0}', space=sflag, size = 0x4, scoped, tag = 'scoped memory for tgcn_forward.1']
    #allocation5 [shape = 'u8[65536]{0}', space=vmem, size = 0x10000, scoped, tag = 'input window, operand 1, single buffered']
    #allocation6 [shape = 's32[1]{0}', space=sflag, size = 0x4, scoped, tag = 'scoped memory for tgcn_forward.1']
    %9 = vsyncpa [#allocation4], 0
    %10 = vsyncpa [#allocation6], 0
    // Predicated region
    $region2: #{tgcn_forward.1} parent=1 // pred_check
      _
    $region3: #{tgcn_forward.1} parent=1 // pred_check_branch
      %12 = sbr.rel (0) target = $region5
    $region4: #{tgcn_forward.1} parent=1 // pred_region
      %s14 = ssub.s32 8192, 8192
      %15 = vsyncadd [#allocation4], %s14
      %s17 = sshll.u32 [#allocation3], 4
      %s18 = int_to_ptr.vmem [resolvable:$true] %s17
      %20 = dma.hbm_to_vmem [thread:$0]  %s0, 8192, %s18, [#allocation4]
    $region5: #{tgcn_forward.1} parent=1 // pred_fallthru
      _
    // Predicated region
    $region6: #{tgcn_forward.1} parent=1 // pred_check
      _
    $region7: #{tgcn_forward.1} parent=1 // pred_check_branch
      %22 = sbr.rel (0) target = $region9
    $region8: #{tgcn_forward.1} parent=1 // pred_region
      %s24 = ssub.s32 2048, 2048
      %25 = vsyncadd [#allocation6], %s24
      %s27 = sshll.u32 [#allocation5], 4
      %s28 = int_to_ptr.vmem [resolvable:$true] %s27
      %30 = dma.hbm_to_vmem [thread:$0]  %s1, 2048, %s28, [#allocation6]
    $region9: #{tgcn_forward.1} parent=1 // pred_fallthru
      _
    // Predicated region
    $region10: #{tgcn_forward.1} parent=1 // pred_check
      _
    $region11: #{tgcn_forward.1} parent=1 // pred_check_branch
      %32 = sbr.rel (0) target = $region13
    $region12: #{tgcn_forward.1} parent=1 // pred_region
      _
    $region13: #{tgcn_forward.1} parent=1 // pred_fallthru
      _
    // Predicated region
    $region14: #{tgcn_forward.1} parent=1 // pred_check
      _
    $region15: #{tgcn_forward.1} parent=1 // pred_check_branch
      %34 = sbr.rel (0) target = $region17
    $region16: #{tgcn_forward.1} parent=1 // pred_region
      %35 = dma.done [#allocation4], 8192
    $region17: #{tgcn_forward.1} parent=1 // pred_fallthru
      _
    // Predicated region
    $region18: #{tgcn_forward.1} parent=1 // pred_check
      _
    $region19: #{tgcn_forward.1} parent=1 // pred_check_branch
      %37 = sbr.rel (0) target = $region21
    $region20: #{tgcn_forward.1} parent=1 // pred_region
      %38 = dma.done [#allocation6], 2048
    $region21: #{tgcn_forward.1} parent=1 // pred_fallthru
      _
    %v39 = vld [vmem:[#allocation3] sm:$0xff]
    %v40 = vld [vmem:[#allocation3 + $0x8] sm:$0xff]
    %v41 = vld [vmem:[#allocation3 + $0x10] sm:$0xff]
    %v42 = vld [vmem:[#allocation3 + $0x18] sm:$0xff]
    %v43 = vld [vmem:[#allocation3 + $0x20] sm:$0xff]
    %v44 = vld [vmem:[#allocation3 + $0x28] sm:$0xff]
    %v45 = vld [vmem:[#allocation3 + $0x30] sm:$0xff]
    %v46 = vld [vmem:[#allocation3 + $0x38] sm:$0xff]
    %v47 = vld [vmem:[#allocation3 + $0x40] sm:$0xff]
    %v48 = vld [vmem:[#allocation3 + $0x48] sm:$0xff]
    %v49 = vld [vmem:[#allocation3 + $0x50] sm:$0xff]
    %v50 = vld [vmem:[#allocation3 + $0x58] sm:$0xff]
    %v51 = vld [vmem:[#allocation3 + $0x60] sm:$0xff]
    %v52 = vld [vmem:[#allocation3 + $0x68] sm:$0xff]
    %v53 = vld [vmem:[#allocation3 + $0x70] sm:$0xff]
    %v54 = vld [vmem:[#allocation3 + $0x78] sm:$0xff]
    %v55 = vld [vmem:[#allocation3 + $0x80] sm:$0xff]
    %v56 = vld [vmem:[#allocation3 + $0x88] sm:$0xff]
    %v57 = vld [vmem:[#allocation3 + $0x90] sm:$0xff]
    %v58 = vld [vmem:[#allocation3 + $0x98] sm:$0xff]
    %v59 = vld [vmem:[#allocation3 + $0xa0] sm:$0xff]
    %v60 = vld [vmem:[#allocation3 + $0xa8] sm:$0xff]
    %v61 = vld [vmem:[#allocation3 + $0xb0] sm:$0xff]
    %v62 = vld [vmem:[#allocation3 + $0xb8] sm:$0xff]
    %v63 = vld [vmem:[#allocation3 + $0xc0] sm:$0xff]
    %v64 = vld [vmem:[#allocation3 + $0xc8] sm:$0xff]
    %v65 = vld [vmem:[#allocation3 + $0xd0] sm:$0xff]
    %v66 = vld [vmem:[#allocation3 + $0xd8] sm:$0xff]
    %v67 = vld [vmem:[#allocation3 + $0xe0] sm:$0xff]
    %v68 = vld [vmem:[#allocation3 + $0xe8] sm:$0xff]
    %v69 = vld [vmem:[#allocation3 + $0xf0] sm:$0xff]
    %v70 = vld [vmem:[#allocation3 + $0xf8] sm:$0xff]
    %v71 = vld [vmem:[#allocation3 + $0x100] sm:$0xff]
    %v72 = vld [vmem:[#allocation3 + $0x108] sm:$0xff]
    %v73 = vld [vmem:[#allocation3 + $0x110] sm:$0xff]
    %v74 = vld [vmem:[#allocation3 + $0x118] sm:$0xff]
    %v75 = vld [vmem:[#allocation3 + $0x120] sm:$0xff]
    %v76 = vld [vmem:[#allocation3 + $0x128] sm:$0xff]
    %v77 = vld [vmem:[#allocation3 + $0x130] sm:$0xff]
    %v78 = vld [vmem:[#allocation3 + $0x138] sm:$0xff]
    %v79 = vld [vmem:[#allocation3 + $0x140] sm:$0xff]
    %v80 = vld [vmem:[#allocation3 + $0x148] sm:$0xff]
    %v81 = vld [vmem:[#allocation3 + $0x150] sm:$0xff]
    %v82 = vld [vmem:[#allocation3 + $0x158] sm:$0xff]
    %v83 = vld [vmem:[#allocation3 + $0x160] sm:$0xff]
    %v84 = vld [vmem:[#allocation3 + $0x168] sm:$0xff]
    %v85 = vld [vmem:[#allocation3 + $0x170] sm:$0xff]
    %v86 = vld [vmem:[#allocation3 + $0x178] sm:$0xff]
    %v87 = vld [vmem:[#allocation3 + $0x180] sm:$0xff]
    %v88 = vld [vmem:[#allocation3 + $0x188] sm:$0xff]
    %v89 = vld [vmem:[#allocation3 + $0x190] sm:$0xff]
    %v90 = vld [vmem:[#allocation3 + $0x198] sm:$0xff]
    %v91 = vld [vmem:[#allocation3 + $0x1a0] sm:$0xff]
    %v92 = vld [vmem:[#allocation3 + $0x1a8] sm:$0xff]
    %v93 = vld [vmem:[#allocation3 + $0x1b0] sm:$0xff]
    %v94 = vld [vmem:[#allocation3 + $0x1b8] sm:$0xff]
    %v95 = vld [vmem:[#allocation3 + $0x1c0] sm:$0xff]
    %v96 = vld [vmem:[#allocation3 + $0x1c8] sm:$0xff]
    %v97 = vld [vmem:[#allocation3 + $0x1d0] sm:$0xff]
    %v98 = vld [vmem:[#allocation3 + $0x1d8] sm:$0xff]
    %v99 = vld [vmem:[#allocation3 + $0x1e0] sm:$0xff]
    %v100 = vld [vmem:[#allocation3 + $0x1e8] sm:$0xff]
    %v101 = vld [vmem:[#allocation3 + $0x1f0] sm:$0xff]
    %v102 = vld [vmem:[#allocation3 + $0x1f8] sm:$0xff]
    %v103 = vld [vmem:[#allocation5] sm:$0xff]
    %v104 = vld [vmem:[#allocation5 + $0x8] sm:$0xff]
    %v105 = vld [vmem:[#allocation5 + $0x10] sm:$0xff]
    %v106 = vld [vmem:[#allocation5 + $0x18] sm:$0xff]
    %v107 = vld [vmem:[#allocation5 + $0x20] sm:$0xff]
    %v108 = vld [vmem:[#allocation5 + $0x28] sm:$0xff]
    %v109 = vld [vmem:[#allocation5 + $0x30] sm:$0xff]
    %v110 = vld [vmem:[#allocation5 + $0x38] sm:$0xff]
    %v111 = vld [vmem:[#allocation5 + $0x40] sm:$0xff]
    %v112 = vld [vmem:[#allocation5 + $0x48] sm:$0xff]
    %v113 = vld [vmem:[#allocation5 + $0x50] sm:$0xff]
    %v114 = vld [vmem:[#allocation5 + $0x58] sm:$0xff]
    %v115 = vld [vmem:[#allocation5 + $0x60] sm:$0xff]
    %v116 = vld [vmem:[#allocation5 + $0x68] sm:$0xff]
    %v117 = vld [vmem:[#allocation5 + $0x70] sm:$0xff]
    %v118 = vld [vmem:[#allocation5 + $0x78] sm:$0xff]
    %v135 = vlaneseq
    %v136 = vshrl.u32 %v135, 7
    %v137 = vsub.s32 0, %v136
    %v138 = vrot.slane %v103, %v137
    %v139 = vlaneseq
    %v140 = vshrl.u32 %v139, 7
    %v141 = vsub.s32 1, %v140
    %v142 = vrot.slane %v103, %v141
    %v143 = vlaneseq
    %v144 = vshrl.u32 %v143, 7
    %v145 = vsub.s32 2, %v144
    %v146 = vrot.slane %v103, %v145
    %v147 = vlaneseq
    %v148 = vshrl.u32 %v147, 7
    %v149 = vsub.s32 3, %v148
    %v150 = vrot.slane %v103, %v149
    %v151 = vlaneseq
    %v152 = vshrl.u32 %v151, 7
    %v153 = vsub.s32 4, %v152
    %v154 = vrot.slane %v103, %v153
    %v155 = vlaneseq
    %v156 = vshrl.u32 %v155, 7
    %v157 = vsub.s32 5, %v156
    %v158 = vrot.slane %v103, %v157
    %v159 = vlaneseq
    %v160 = vshrl.u32 %v159, 7
    %v161 = vsub.s32 6, %v160
    %v162 = vrot.slane %v103, %v161
    %v163 = vlaneseq
    %v164 = vshrl.u32 %v163, 7
    %v165 = vsub.s32 7, %v164
    %v166 = vrot.slane %v103, %v165
    %v167 = vlaneseq
    %v168 = vshrl.u32 %v167, 7
    %v169 = vsub.s32 0, %v168
    %v170 = vrot.slane %v104, %v169
    %v171 = vlaneseq
    %v172 = vshrl.u32 %v171, 7
    %v173 = vsub.s32 1, %v172
    %v174 = vrot.slane %v104, %v173
    %v175 = vlaneseq
    %v176 = vshrl.u32 %v175, 7
    %v177 = vsub.s32 2, %v176
    %v178 = vrot.slane %v104, %v177
    %v179 = vlaneseq
    %v180 = vshrl.u32 %v179, 7
    %v181 = vsub.s32 3, %v180
    %v182 = vrot.slane %v104, %v181
    %v183 = vlaneseq
    %v184 = vshrl.u32 %v183, 7
    %v185 = vsub.s32 4, %v184
    %v186 = vrot.slane %v104, %v185
    %v187 = vlaneseq
    %v188 = vshrl.u32 %v187, 7
    %v189 = vsub.s32 5, %v188
    %v190 = vrot.slane %v104, %v189
    %v191 = vlaneseq
    %v192 = vshrl.u32 %v191, 7
    %v193 = vsub.s32 6, %v192
    %v194 = vrot.slane %v104, %v193
    %v195 = vlaneseq
    %v196 = vshrl.u32 %v195, 7
    %v197 = vsub.s32 7, %v196
    %v198 = vrot.slane %v104, %v197
    %v199 = vlaneseq
    %v200 = vshrl.u32 %v199, 7
    %v201 = vsub.s32 0, %v200
    %v202 = vrot.slane %v105, %v201
    %v203 = vlaneseq
    %v204 = vshrl.u32 %v203, 7
    %v205 = vsub.s32 1, %v204
    %v206 = vrot.slane %v105, %v205
    %v207 = vlaneseq
    %v208 = vshrl.u32 %v207, 7
    %v209 = vsub.s32 2, %v208
    %v210 = vrot.slane %v105, %v209
    %v211 = vlaneseq
    %v212 = vshrl.u32 %v211, 7
    %v213 = vsub.s32 3, %v212
    %v214 = vrot.slane %v105, %v213
    %v215 = vlaneseq
    %v216 = vshrl.u32 %v215, 7
    %v217 = vsub.s32 4, %v216
    %v218 = vrot.slane %v105, %v217
    %v219 = vlaneseq
    %v220 = vshrl.u32 %v219, 7
    %v221 = vsub.s32 5, %v220
    %v222 = vrot.slane %v105, %v221
    %v223 = vlaneseq
    %v224 = vshrl.u32 %v223, 7
    %v225 = vsub.s32 6, %v224
    %v226 = vrot.slane %v105, %v225
    %v227 = vlaneseq
    %v228 = vshrl.u32 %v227, 7
    %v229 = vsub.s32 7, %v228
    %v230 = vrot.slane %v105, %v229
    %v231 = vlaneseq
    %v232 = vshrl.u32 %v231, 7
    %v233 = vsub.s32 0, %v232
    %v234 = vrot.slane %v106, %v233
    %v235 = vlaneseq
    %v236 = vshrl.u32 %v235, 7
    %v237 = vsub.s32 1, %v236
    %v238 = vrot.slane %v106, %v237
    %v239 = vlaneseq
    %v240 = vshrl.u32 %v239, 7
    %v241 = vsub.s32 2, %v240
    %v242 = vrot.slane %v106, %v241
    %v243 = vlaneseq
    %v244 = vshrl.u32 %v243, 7
    %v245 = vsub.s32 3, %v244
    %v246 = vrot.slane %v106, %v245
    %v247 = vlaneseq
    %v248 = vshrl.u32 %v247, 7
    %v249 = vsub.s32 4, %v248
    %v250 = vrot.slane %v106, %v249
    %v251 = vlaneseq
    %v252 = vshrl.u32 %v251, 7
    %v253 = vsub.s32 5, %v252
    %v254 = vrot.slane %v106, %v253
    %v255 = vlaneseq
    %v256 = vshrl.u32 %v255, 7
    %v257 = vsub.s32 6, %v256
    %v258 = vrot.slane %v106, %v257
    %v259 = vlaneseq
    %v260 = vshrl.u32 %v259, 7
    %v261 = vsub.s32 7, %v260
    %v262 = vrot.slane %v106, %v261
    %v263 = vlaneseq
    %v264 = vshrl.u32 %v263, 7
    %v265 = vsub.s32 0, %v264
    %v266 = vrot.slane %v107, %v265
    %v267 = vlaneseq
    %v268 = vshrl.u32 %v267, 7
    %v269 = vsub.s32 1, %v268
    %v270 = vrot.slane %v107, %v269
    %v271 = vlaneseq
    %v272 = vshrl.u32 %v271, 7
    %v273 = vsub.s32 2, %v272
    %v274 = vrot.slane %v107, %v273
    %v275 = vlaneseq
    %v276 = vshrl.u32 %v275, 7
    %v277 = vsub.s32 3, %v276
    %v278 = vrot.slane %v107, %v277
    %v279 = vlaneseq
    %v280 = vshrl.u32 %v279, 7
    %v281 = vsub.s32 4, %v280
    %v282 = vrot.slane %v107, %v281
    %v283 = vlaneseq
    %v284 = vshrl.u32 %v283, 7
    %v285 = vsub.s32 5, %v284
    %v286 = vrot.slane %v107, %v285
    %v287 = vlaneseq
    %v288 = vshrl.u32 %v287, 7
    %v289 = vsub.s32 6, %v288
    %v290 = vrot.slane %v107, %v289
    %v291 = vlaneseq
    %v292 = vshrl.u32 %v291, 7
    %v293 = vsub.s32 7, %v292
    %v294 = vrot.slane %v107, %v293
    %v295 = vlaneseq
    %v296 = vshrl.u32 %v295, 7
    %v297 = vsub.s32 0, %v296
    %v298 = vrot.slane %v108, %v297
    %v299 = vlaneseq
    %v300 = vshrl.u32 %v299, 7
    %v301 = vsub.s32 1, %v300
    %v302 = vrot.slane %v108, %v301
    %v303 = vlaneseq
    %v304 = vshrl.u32 %v303, 7
    %v305 = vsub.s32 2, %v304
    %v306 = vrot.slane %v108, %v305
    %v307 = vlaneseq
    %v308 = vshrl.u32 %v307, 7
    %v309 = vsub.s32 3, %v308
    %v310 = vrot.slane %v108, %v309
    %v311 = vlaneseq
    %v312 = vshrl.u32 %v311, 7
    %v313 = vsub.s32 4, %v312
    %v314 = vrot.slane %v108, %v313
    %v315 = vlaneseq
    %v316 = vshrl.u32 %v315, 7
    %v317 = vsub.s32 5, %v316
    %v318 = vrot.slane %v108, %v317
    %v319 = vlaneseq
    %v320 = vshrl.u32 %v319, 7
    %v321 = vsub.s32 6, %v320
    %v322 = vrot.slane %v108, %v321
    %v323 = vlaneseq
    %v324 = vshrl.u32 %v323, 7
    %v325 = vsub.s32 7, %v324
    %v326 = vrot.slane %v108, %v325
    %v327 = vlaneseq
    %v328 = vshrl.u32 %v327, 7
    %v329 = vsub.s32 0, %v328
    %v330 = vrot.slane %v109, %v329
    %v331 = vlaneseq
    %v332 = vshrl.u32 %v331, 7
    %v333 = vsub.s32 1, %v332
    %v334 = vrot.slane %v109, %v333
    %v335 = vlaneseq
    %v336 = vshrl.u32 %v335, 7
    %v337 = vsub.s32 2, %v336
    %v338 = vrot.slane %v109, %v337
    %v339 = vlaneseq
    %v340 = vshrl.u32 %v339, 7
    %v341 = vsub.s32 3, %v340
    %v342 = vrot.slane %v109, %v341
    %v343 = vlaneseq
    %v344 = vshrl.u32 %v343, 7
    %v345 = vsub.s32 4, %v344
    %v346 = vrot.slane %v109, %v345
    %v347 = vlaneseq
    %v348 = vshrl.u32 %v347, 7
    %v349 = vsub.s32 5, %v348
    %v350 = vrot.slane %v109, %v349
    %v351 = vlaneseq
    %v352 = vshrl.u32 %v351, 7
    %v353 = vsub.s32 6, %v352
    %v354 = vrot.slane %v109, %v353
    %v355 = vlaneseq
    %v356 = vshrl.u32 %v355, 7
    %v357 = vsub.s32 7, %v356
    %v358 = vrot.slane %v109, %v357
    %v359 = vlaneseq
    %v360 = vshrl.u32 %v359, 7
    %v361 = vsub.s32 0, %v360
    %v362 = vrot.slane %v110, %v361
    %v363 = vlaneseq
    %v364 = vshrl.u32 %v363, 7
    %v365 = vsub.s32 1, %v364
    %v366 = vrot.slane %v110, %v365
    %v367 = vlaneseq
    %v368 = vshrl.u32 %v367, 7
    %v369 = vsub.s32 2, %v368
    %v370 = vrot.slane %v110, %v369
    %v371 = vlaneseq
    %v372 = vshrl.u32 %v371, 7
    %v373 = vsub.s32 3, %v372
    %v374 = vrot.slane %v110, %v373
    %v375 = vlaneseq
    %v376 = vshrl.u32 %v375, 7
    %v377 = vsub.s32 4, %v376
    %v378 = vrot.slane %v110, %v377
    %v379 = vlaneseq
    %v380 = vshrl.u32 %v379, 7
    %v381 = vsub.s32 5, %v380
    %v382 = vrot.slane %v110, %v381
    %v383 = vlaneseq
    %v384 = vshrl.u32 %v383, 7
    %v385 = vsub.s32 6, %v384
    %v386 = vrot.slane %v110, %v385
    %v387 = vlaneseq
    %v388 = vshrl.u32 %v387, 7
    %v389 = vsub.s32 7, %v388
    %v390 = vrot.slane %v110, %v389
    %v391 = vlaneseq
    %v392 = vshrl.u32 %v391, 7
    %v393 = vsub.s32 0, %v392
    %v394 = vrot.slane %v111, %v393
    %v395 = vlaneseq
    %v396 = vshrl.u32 %v395, 7
    %v397 = vsub.s32 1, %v396
    %v398 = vrot.slane %v111, %v397
    %v399 = vlaneseq
    %v400 = vshrl.u32 %v399, 7
    %v401 = vsub.s32 2, %v400
    %v402 = vrot.slane %v111, %v401
    %v403 = vlaneseq
    %v404 = vshrl.u32 %v403, 7
    %v405 = vsub.s32 3, %v404
    %v406 = vrot.slane %v111, %v405
    %v407 = vlaneseq
    %v408 = vshrl.u32 %v407, 7
    %v409 = vsub.s32 4, %v408
    %v410 = vrot.slane %v111, %v409
    %v411 = vlaneseq
    %v412 = vshrl.u32 %v411, 7
    %v413 = vsub.s32 5, %v412
    %v414 = vrot.slane %v111, %v413
    %v415 = vlaneseq
    %v416 = vshrl.u32 %v415, 7
    %v417 = vsub.s32 6, %v416
    %v418 = vrot.slane %v111, %v417
    %v419 = vlaneseq
    %v420 = vshrl.u32 %v419, 7
    %v421 = vsub.s32 7, %v420
    %v422 = vrot.slane %v111, %v421
    %v423 = vlaneseq
    %v424 = vshrl.u32 %v423, 7
    %v425 = vsub.s32 0, %v424
    %v426 = vrot.slane %v112, %v425
    %v427 = vlaneseq
    %v428 = vshrl.u32 %v427, 7
    %v429 = vsub.s32 1, %v428
    %v430 = vrot.slane %v112, %v429
    %v431 = vlaneseq
    %v432 = vshrl.u32 %v431, 7
    %v433 = vsub.s32 2, %v432
    %v434 = vrot.slane %v112, %v433
    %v435 = vlaneseq
    %v436 = vshrl.u32 %v435, 7
    %v437 = vsub.s32 3, %v436
    %v438 = vrot.slane %v112, %v437
    %v439 = vlaneseq
    %v440 = vshrl.u32 %v439, 7
    %v441 = vsub.s32 4, %v440
    %v442 = vrot.slane %v112, %v441
    %v443 = vlaneseq
    %v444 = vshrl.u32 %v443, 7
    %v445 = vsub.s32 5, %v444
    %v446 = vrot.slane %v112, %v445
    %v447 = vlaneseq
    %v448 = vshrl.u32 %v447, 7
    %v449 = vsub.s32 6, %v448
    %v450 = vrot.slane %v112, %v449
    %v451 = vlaneseq
    %v452 = vshrl.u32 %v451, 7
    %v453 = vsub.s32 7, %v452
    %v454 = vrot.slane %v112, %v453
    %v455 = vlaneseq
    %v456 = vshrl.u32 %v455, 7
    %v457 = vsub.s32 0, %v456
    %v458 = vrot.slane %v113, %v457
    %v459 = vlaneseq
    %v460 = vshrl.u32 %v459, 7
    %v461 = vsub.s32 1, %v460
    %v462 = vrot.slane %v113, %v461
    %v463 = vlaneseq
    %v464 = vshrl.u32 %v463, 7
    %v465 = vsub.s32 2, %v464
    %v466 = vrot.slane %v113, %v465
    %v467 = vlaneseq
    %v468 = vshrl.u32 %v467, 7
    %v469 = vsub.s32 3, %v468
    %v470 = vrot.slane %v113, %v469
    %v471 = vlaneseq
    %v472 = vshrl.u32 %v471, 7
    %v473 = vsub.s32 4, %v472
    %v474 = vrot.slane %v113, %v473
    %v475 = vlaneseq
    %v476 = vshrl.u32 %v475, 7
    %v477 = vsub.s32 5, %v476
    %v478 = vrot.slane %v113, %v477
    %v479 = vlaneseq
    %v480 = vshrl.u32 %v479, 7
    %v481 = vsub.s32 6, %v480
    %v482 = vrot.slane %v113, %v481
    %v483 = vlaneseq
    %v484 = vshrl.u32 %v483, 7
    %v485 = vsub.s32 7, %v484
    %v486 = vrot.slane %v113, %v485
    %v487 = vlaneseq
    %v488 = vshrl.u32 %v487, 7
    %v489 = vsub.s32 0, %v488
    %v490 = vrot.slane %v114, %v489
    %v491 = vlaneseq
    %v492 = vshrl.u32 %v491, 7
    %v493 = vsub.s32 1, %v492
    %v494 = vrot.slane %v114, %v493
    %v495 = vlaneseq
    %v496 = vshrl.u32 %v495, 7
    %v497 = vsub.s32 2, %v496
    %v498 = vrot.slane %v114, %v497
    %v499 = vlaneseq
    %v500 = vshrl.u32 %v499, 7
    %v501 = vsub.s32 3, %v500
    %v502 = vrot.slane %v114, %v501
    %v503 = vlaneseq
    %v504 = vshrl.u32 %v503, 7
    %v505 = vsub.s32 4, %v504
    %v506 = vrot.slane %v114, %v505
    %v507 = vlaneseq
    %v508 = vshrl.u32 %v507, 7
    %v509 = vsub.s32 5, %v508
    %v510 = vrot.slane %v114, %v509
    %v511 = vlaneseq
    %v512 = vshrl.u32 %v511, 7
    %v513 = vsub.s32 6, %v512
    %v514 = vrot.slane %v114, %v513
    %v515 = vlaneseq
    %v516 = vshrl.u32 %v515, 7
    %v517 = vsub.s32 7, %v516
    %v518 = vrot.slane %v114, %v517
    %v519 = vlaneseq
    %v520 = vshrl.u32 %v519, 7
    %v521 = vsub.s32 0, %v520
    %v522 = vrot.slane %v115, %v521
    %v523 = vlaneseq
    %v524 = vshrl.u32 %v523, 7
    %v525 = vsub.s32 1, %v524
    %v526 = vrot.slane %v115, %v525
    %v527 = vlaneseq
    %v528 = vshrl.u32 %v527, 7
    %v529 = vsub.s32 2, %v528
    %v530 = vrot.slane %v115, %v529
    %v531 = vlaneseq
    %v532 = vshrl.u32 %v531, 7
    %v533 = vsub.s32 3, %v532
    %v534 = vrot.slane %v115, %v533
    %v535 = vlaneseq
    %v536 = vshrl.u32 %v535, 7
    %v537 = vsub.s32 4, %v536
    %v538 = vrot.slane %v115, %v537
    %v539 = vlaneseq
    %v540 = vshrl.u32 %v539, 7
    %v541 = vsub.s32 5, %v540
    %v542 = vrot.slane %v115, %v541
    %v543 = vlaneseq
    %v544 = vshrl.u32 %v543, 7
    %v545 = vsub.s32 6, %v544
    %v546 = vrot.slane %v115, %v545
    %v547 = vlaneseq
    %v548 = vshrl.u32 %v547, 7
    %v549 = vsub.s32 7, %v548
    %v550 = vrot.slane %v115, %v549
    %v551 = vlaneseq
    %v552 = vshrl.u32 %v551, 7
    %v553 = vsub.s32 0, %v552
    %v554 = vrot.slane %v116, %v553
    %v555 = vlaneseq
    %v556 = vshrl.u32 %v555, 7
    %v557 = vsub.s32 1, %v556
    %v558 = vrot.slane %v116, %v557
    %v559 = vlaneseq
    %v560 = vshrl.u32 %v559, 7
    %v561 = vsub.s32 2, %v560
    %v562 = vrot.slane %v116, %v561
    %v563 = vlaneseq
    %v564 = vshrl.u32 %v563, 7
    %v565 = vsub.s32 3, %v564
    %v566 = vrot.slane %v116, %v565
    %v567 = vlaneseq
    %v568 = vshrl.u32 %v567, 7
    %v569 = vsub.s32 4, %v568
    %v570 = vrot.slane %v116, %v569
    %v571 = vlaneseq
    %v572 = vshrl.u32 %v571, 7
    %v573 = vsub.s32 5, %v572
    %v574 = vrot.slane %v116, %v573
    %v575 = vlaneseq
    %v576 = vshrl.u32 %v575, 7
    %v577 = vsub.s32 6, %v576
    %v578 = vrot.slane %v116, %v577
    %v579 = vlaneseq
    %v580 = vshrl.u32 %v579, 7
    %v581 = vsub.s32 7, %v580
    %v582 = vrot.slane %v116, %v581
    %v583 = vlaneseq
    %v584 = vshrl.u32 %v583, 7
    %v585 = vsub.s32 0, %v584
    %v586 = vrot.slane %v117, %v585
    %v587 = vlaneseq
    %v588 = vshrl.u32 %v587, 7
    %v589 = vsub.s32 1, %v588
    %v590 = vrot.slane %v117, %v589
    %v591 = vlaneseq
    %v592 = vshrl.u32 %v591, 7
    %v593 = vsub.s32 2, %v592
    %v594 = vrot.slane %v117, %v593
    %v595 = vlaneseq
    %v596 = vshrl.u32 %v595, 7
    %v597 = vsub.s32 3, %v596
    %v598 = vrot.slane %v117, %v597
    %v599 = vlaneseq
    %v600 = vshrl.u32 %v599, 7
    %v601 = vsub.s32 4, %v600
    %v602 = vrot.slane %v117, %v601
    %v603 = vlaneseq
    %v604 = vshrl.u32 %v603, 7
    %v605 = vsub.s32 5, %v604
    %v606 = vrot.slane %v117, %v605
    %v607 = vlaneseq
    %v608 = vshrl.u32 %v607, 7
    %v609 = vsub.s32 6, %v608
    %v610 = vrot.slane %v117, %v609
    %v611 = vlaneseq
    %v612 = vshrl.u32 %v611, 7
    %v613 = vsub.s32 7, %v612
    %v614 = vrot.slane %v117, %v613
    %v615 = vlaneseq
    %v616 = vshrl.u32 %v615, 7
    %v617 = vsub.s32 0, %v616
    %v618 = vrot.slane %v118, %v617
    %v619 = vlaneseq
    %v620 = vshrl.u32 %v619, 7
    %v621 = vsub.s32 1, %v620
    %v622 = vrot.slane %v118, %v621
    %v623 = vlaneseq
    %v624 = vshrl.u32 %v623, 7
    %v625 = vsub.s32 2, %v624
    %v626 = vrot.slane %v118, %v625
    %v627 = vlaneseq
    %v628 = vshrl.u32 %v627, 7
    %v629 = vsub.s32 3, %v628
    %v630 = vrot.slane %v118, %v629
    %v631 = vlaneseq
    %v632 = vshrl.u32 %v631, 7
    %v633 = vsub.s32 4, %v632
    %v634 = vrot.slane %v118, %v633
    %v635 = vlaneseq
    %v636 = vshrl.u32 %v635, 7
    %v637 = vsub.s32 5, %v636
    %v638 = vrot.slane %v118, %v637
    %v639 = vlaneseq
    %v640 = vshrl.u32 %v639, 7
    %v641 = vsub.s32 6, %v640
    %v642 = vrot.slane %v118, %v641
    %v643 = vlaneseq
    %v644 = vshrl.u32 %v643, 7
    %v645 = vsub.s32 7, %v644
    %v646 = vrot.slane %v118, %v645
    %v647 = vcombine.low %v138, %v142
    %v648 = vcombine.low %v146, %v150
    %v649 = vcombine.low %v154, %v158
    %v650 = vcombine.low %v162, %v166
    %v651 = vcombine.low %v170, %v174
    %v652 = vcombine.low %v178, %v182
    %v653 = vcombine.low %v186, %v190
    %v654 = vcombine.low %v194, %v198
    %v655 = vcombine.low %v202, %v206
    %v656 = vcombine.low %v210, %v214
    %v657 = vcombine.low %v218, %v222
    %v658 = vcombine.low %v226, %v230
    %v659 = vcombine.low %v234, %v238
    %v660 = vcombine.low %v242, %v246
    %v661 = vcombine.low %v250, %v254
    %v662 = vcombine.low %v258, %v262
    %v663 = vcombine.low %v266, %v270
    %v664 = vcombine.low %v274, %v278
    %v665 = vcombine.low %v282, %v286
    %v666 = vcombine.low %v290, %v294
    %v667 = vcombine.low %v298, %v302
    %v668 = vcombine.low %v306, %v310
    %v669 = vcombine.low %v314, %v318
    %v670 = vcombine.low %v322, %v326
    %v671 = vcombine.low %v330, %v334
    %v672 = vcombine.low %v338, %v342
    %v673 = vcombine.low %v346, %v350
    %v674 = vcombine.low %v354, %v358
    %v675 = vcombine.low %v362, %v366
    %v676 = vcombine.low %v370, %v374
    %v677 = vcombine.low %v378, %v382
    %v678 = vcombine.low %v386, %v390
    %v679 = vcombine.low %v394, %v398
    %v680 = vcombine.low %v402, %v406
    %v681 = vcombine.low %v410, %v414
    %v682 = vcombine.low %v418, %v422
    %v683 = vcombine.low %v426, %v430
    %v684 = vcombine.low %v434, %v438
    %v685 = vcombine.low %v442, %v446
    %v686 = vcombine.low %v450, %v454
    %v687 = vcombine.low %v458, %v462
    %v688 = vcombine.low %v466, %v470
    %v689 = vcombine.low %v474, %v478
    %v690 = vcombine.low %v482, %v486
    %v691 = vcombine.low %v490, %v494
    %v692 = vcombine.low %v498, %v502
    %v693 = vcombine.low %v506, %v510
    %v694 = vcombine.low %v514, %v518
    %v695 = vcombine.low %v522, %v526
    %v696 = vcombine.low %v530, %v534
    %v697 = vcombine.low %v538, %v542
    %v698 = vcombine.low %v546, %v550
    %v699 = vcombine.low %v554, %v558
    %v700 = vcombine.low %v562, %v566
    %v701 = vcombine.low %v570, %v574
    %v702 = vcombine.low %v578, %v582
    %v703 = vcombine.low %v586, %v590
    %v704 = vcombine.low %v594, %v598
    %v705 = vcombine.low %v602, %v606
    %v706 = vcombine.low %v610, %v614
    %v707 = vcombine.low %v618, %v622
    %v708 = vcombine.low %v626, %v630
    %v709 = vcombine.low %v634, %v638
    %v710 = vcombine.low %v642, %v646
    %v775 = vmul.f32 %v39, %v647
    %v776 = vmul.f32 %v40, %v648
    %v777 = vmul.f32 %v41, %v649
    %v778 = vmul.f32 %v42, %v650
    %v779 = vmul.f32 %v43, %v651
    %v780 = vmul.f32 %v44, %v652
    %v781 = vmul.f32 %v45, %v653
    %v782 = vmul.f32 %v46, %v654
    %v783 = vmul.f32 %v47, %v655
    %v784 = vmul.f32 %v48, %v656
    %v785 = vmul.f32 %v49, %v657
    %v786 = vmul.f32 %v50, %v658
    %v787 = vmul.f32 %v51, %v659
    %v788 = vmul.f32 %v52, %v660
    %v789 = vmul.f32 %v53, %v661
    %v790 = vmul.f32 %v54, %v662
    %v791 = vmul.f32 %v55, %v663
    %v792 = vmul.f32 %v56, %v664
    %v793 = vmul.f32 %v57, %v665
    %v794 = vmul.f32 %v58, %v666
    %v795 = vmul.f32 %v59, %v667
    %v796 = vmul.f32 %v60, %v668
    %v797 = vmul.f32 %v61, %v669
    %v798 = vmul.f32 %v62, %v670
    %v799 = vmul.f32 %v63, %v671
    %v800 = vmul.f32 %v64, %v672
    %v801 = vmul.f32 %v65, %v673
    %v802 = vmul.f32 %v66, %v674
    %v803 = vmul.f32 %v67, %v675
    %v804 = vmul.f32 %v68, %v676
    %v805 = vmul.f32 %v69, %v677
    %v806 = vmul.f32 %v70, %v678
    %v807 = vmul.f32 %v71, %v679
    %v808 = vmul.f32 %v72, %v680
    %v809 = vmul.f32 %v73, %v681
    %v810 = vmul.f32 %v74, %v682
    %v811 = vmul.f32 %v75, %v683
    %v812 = vmul.f32 %v76, %v684
    %v813 = vmul.f32 %v77, %v685
    %v814 = vmul.f32 %v78, %v686
    %v815 = vmul.f32 %v79, %v687
    %v816 = vmul.f32 %v80, %v688
    %v817 = vmul.f32 %v81, %v689
    %v818 = vmul.f32 %v82, %v690
    %v819 = vmul.f32 %v83, %v691
    %v820 = vmul.f32 %v84, %v692
    %v821 = vmul.f32 %v85, %v693
    %v822 = vmul.f32 %v86, %v694
    %v823 = vmul.f32 %v87, %v695
    %v824 = vmul.f32 %v88, %v696
    %v825 = vmul.f32 %v89, %v697
    %v826 = vmul.f32 %v90, %v698
    %v827 = vmul.f32 %v91, %v699
    %v828 = vmul.f32 %v92, %v700
    %v829 = vmul.f32 %v93, %v701
    %v830 = vmul.f32 %v94, %v702
    %v831 = vmul.f32 %v95, %v703
    %v832 = vmul.f32 %v96, %v704
    %v833 = vmul.f32 %v97, %v705
    %v834 = vmul.f32 %v98, %v706
    %v835 = vmul.f32 %v99, %v707
    %v836 = vmul.f32 %v100, %v708
    %v837 = vmul.f32 %v101, %v709
    %v838 = vmul.f32 %v102, %v710
    %v903 = vcombine.high %v775, %v775
    %v904 = vcombine.high %v776, %v776
    %v905 = vcombine.high %v777, %v777
    %v906 = vcombine.high %v778, %v778
    %v907 = vcombine.high %v779, %v779
    %v908 = vcombine.high %v780, %v780
    %v909 = vcombine.high %v781, %v781
    %v910 = vcombine.high %v782, %v782
    %v911 = vcombine.high %v783, %v783
    %v912 = vcombine.high %v784, %v784
    %v913 = vcombine.high %v785, %v785
    %v914 = vcombine.high %v786, %v786
    %v915 = vcombine.high %v787, %v787
    %v916 = vcombine.high %v788, %v788
    %v917 = vcombine.high %v789, %v789
    %v918 = vcombine.high %v790, %v790
    %v919 = vcombine.high %v791, %v791
    %v920 = vcombine.high %v792, %v792
    %v921 = vcombine.high %v793, %v793
    %v922 = vcombine.high %v794, %v794
    %v923 = vcombine.high %v795, %v795
    %v924 = vcombine.high %v796, %v796
    %v925 = vcombine.high %v797, %v797
    %v926 = vcombine.high %v798, %v798
    %v927 = vcombine.high %v799, %v799
    %v928 = vcombine.high %v800, %v800
    %v929 = vcombine.high %v801, %v801
    %v930 = vcombine.high %v802, %v802
    %v931 = vcombine.high %v803, %v803
    %v932 = vcombine.high %v804, %v804
    %v933 = vcombine.high %v805, %v805
    %v934 = vcombine.high %v806, %v806
    %v935 = vcombine.high %v807, %v807
    %v936 = vcombine.high %v808, %v808
    %v937 = vcombine.high %v809, %v809
    %v938 = vcombine.high %v810, %v810
    %v939 = vcombine.high %v811, %v811
    %v940 = vcombine.high %v812, %v812
    %v941 = vcombine.high %v813, %v813
    %v942 = vcombine.high %v814, %v814
    %v943 = vcombine.high %v815, %v815
    %v944 = vcombine.high %v816, %v816
    %v945 = vcombine.high %v817, %v817
    %v946 = vcombine.high %v818, %v818
    %v947 = vcombine.high %v819, %v819
    %v948 = vcombine.high %v820, %v820
    %v949 = vcombine.high %v821, %v821
    %v950 = vcombine.high %v822, %v822
    %v951 = vcombine.high %v823, %v823
    %v952 = vcombine.high %v824, %v824
    %v953 = vcombine.high %v825, %v825
    %v954 = vcombine.high %v826, %v826
    %v955 = vcombine.high %v827, %v827
    %v956 = vcombine.high %v828, %v828
    %v957 = vcombine.high %v829, %v829
    %v958 = vcombine.high %v830, %v830
    %v959 = vcombine.high %v831, %v831
    %v960 = vcombine.high %v832, %v832
    %v961 = vcombine.high %v833, %v833
    %v962 = vcombine.high %v834, %v834
    %v963 = vcombine.high %v835, %v835
    %v964 = vcombine.high %v836, %v836
    %v965 = vcombine.high %v837, %v837
    %v966 = vcombine.high %v838, %v838
    %vm1031 = vcmask 1043456
    %v1032 = vsel %vm1031, %v775, 0.0
    %v1033 = vsel %vm1031, %v903, 0.0
    %v1034 = vadd.f32 %v1032, %v1033
    %v1035 = vsel %vm1031, %v776, 0.0
    %v1036 = vadd.f32 %v1034, %v1035
    %v1037 = vsel %vm1031, %v904, 0.0
    %v1038 = vadd.f32 %v1036, %v1037
    %v1039 = vsel %vm1031, %v777, 0.0
    %v1040 = vadd.f32 %v1038, %v1039
    %v1041 = vsel %vm1031, %v905, 0.0
    %v1042 = vadd.f32 %v1040, %v1041
    %v1043 = vsel %vm1031, %v778, 0.0
    %v1044 = vadd.f32 %v1042, %v1043
    %v1045 = vsel %vm1031, %v906, 0.0
    %v1046 = vadd.f32 %v1044, %v1045
    %v1047 = vsel %vm1031, %v779, 0.0
    %v1048 = vadd.f32 %v1046, %v1047
    %v1049 = vsel %vm1031, %v907, 0.0
    %v1050 = vadd.f32 %v1048, %v1049
    %v1051 = vsel %vm1031, %v780, 0.0
    %v1052 = vadd.f32 %v1050, %v1051
    %v1053 = vsel %vm1031, %v908, 0.0
    %v1054 = vadd.f32 %v1052, %v1053
    %v1055 = vsel %vm1031, %v781, 0.0
    %v1056 = vadd.f32 %v1054, %v1055
    %v1057 = vsel %vm1031, %v909, 0.0
    %v1058 = vadd.f32 %v1056, %v1057
    %v1059 = vsel %vm1031, %v782, 0.0
    %v1060 = vadd.f32 %v1058, %v1059
    %v1061 = vsel %vm1031, %v910, 0.0
    %v1062 = vadd.f32 %v1060, %v1061
    %v1063 = vsel %vm1031, %v783, 0.0
    %v1064 = vadd.f32 %v1062, %v1063
    %v1065 = vsel %vm1031, %v911, 0.0
    %v1066 = vadd.f32 %v1064, %v1065
    %v1067 = vsel %vm1031, %v784, 0.0
    %v1068 = vadd.f32 %v1066, %v1067
    %v1069 = vsel %vm1031, %v912, 0.0
    %v1070 = vadd.f32 %v1068, %v1069
    %v1071 = vsel %vm1031, %v785, 0.0
    %v1072 = vadd.f32 %v1070, %v1071
    %v1073 = vsel %vm1031, %v913, 0.0
    %v1074 = vadd.f32 %v1072, %v1073
    %v1075 = vsel %vm1031, %v786, 0.0
    %v1076 = vadd.f32 %v1074, %v1075
    %v1077 = vsel %vm1031, %v914, 0.0
    %v1078 = vadd.f32 %v1076, %v1077
    %v1079 = vsel %vm1031, %v787, 0.0
    %v1080 = vadd.f32 %v1078, %v1079
    %v1081 = vsel %vm1031, %v915, 0.0
    %v1082 = vadd.f32 %v1080, %v1081
    %v1083 = vsel %vm1031, %v788, 0.0
    %v1084 = vadd.f32 %v1082, %v1083
    %v1085 = vsel %vm1031, %v916, 0.0
    %v1086 = vadd.f32 %v1084, %v1085
    %v1087 = vsel %vm1031, %v789, 0.0
    %v1088 = vadd.f32 %v1086, %v1087
    %v1089 = vsel %vm1031, %v917, 0.0
    %v1090 = vadd.f32 %v1088, %v1089
    %v1091 = vsel %vm1031, %v790, 0.0
    %v1092 = vadd.f32 %v1090, %v1091
    %v1093 = vsel %vm1031, %v918, 0.0
    %v1094 = vadd.f32 %v1092, %v1093
    %v1095 = vsel %vm1031, %v791, 0.0
    %v1096 = vadd.f32 %v1094, %v1095
    %v1097 = vsel %vm1031, %v919, 0.0
    %v1098 = vadd.f32 %v1096, %v1097
    %v1099 = vsel %vm1031, %v792, 0.0
    %v1100 = vadd.f32 %v1098, %v1099
    %v1101 = vsel %vm1031, %v920, 0.0
    %v1102 = vadd.f32 %v1100, %v1101
    %v1103 = vsel %vm1031, %v793, 0.0
    %v1104 = vadd.f32 %v1102, %v1103
    %v1105 = vsel %vm1031, %v921, 0.0
    %v1106 = vadd.f32 %v1104, %v1105
    %v1107 = vsel %vm1031, %v794, 0.0
    %v1108 = vadd.f32 %v1106, %v1107
    %v1109 = vsel %vm1031, %v922, 0.0
    %v1110 = vadd.f32 %v1108, %v1109
    %v1111 = vsel %vm1031, %v795, 0.0
    %v1112 = vadd.f32 %v1110, %v1111
    %v1113 = vsel %vm1031, %v923, 0.0
    %v1114 = vadd.f32 %v1112, %v1113
    %v1115 = vsel %vm1031, %v796, 0.0
    %v1116 = vadd.f32 %v1114, %v1115
    %v1117 = vsel %vm1031, %v924, 0.0
    %v1118 = vadd.f32 %v1116, %v1117
    %v1119 = vsel %vm1031, %v797, 0.0
    %v1120 = vadd.f32 %v1118, %v1119
    %v1121 = vsel %vm1031, %v925, 0.0
    %v1122 = vadd.f32 %v1120, %v1121
    %v1123 = vsel %vm1031, %v798, 0.0
    %v1124 = vadd.f32 %v1122, %v1123
    %v1125 = vsel %vm1031, %v926, 0.0
    %v1126 = vadd.f32 %v1124, %v1125
    %v1127 = vsel %vm1031, %v799, 0.0
    %v1128 = vadd.f32 %v1126, %v1127
    %v1129 = vsel %vm1031, %v927, 0.0
    %v1130 = vadd.f32 %v1128, %v1129
    %v1131 = vsel %vm1031, %v800, 0.0
    %v1132 = vadd.f32 %v1130, %v1131
    %v1133 = vsel %vm1031, %v928, 0.0
    %v1134 = vadd.f32 %v1132, %v1133
    %v1135 = vsel %vm1031, %v801, 0.0
    %v1136 = vadd.f32 %v1134, %v1135
    %v1137 = vsel %vm1031, %v929, 0.0
    %v1138 = vadd.f32 %v1136, %v1137
    %v1139 = vsel %vm1031, %v802, 0.0
    %v1140 = vadd.f32 %v1138, %v1139
    %v1141 = vsel %vm1031, %v930, 0.0
    %v1142 = vadd.f32 %v1140, %v1141
    %v1143 = vsel %vm1031, %v803, 0.0
    %v1144 = vadd.f32 %v1142, %v1143
    %v1145 = vsel %vm1031, %v931, 0.0
    %v1146 = vadd.f32 %v1144, %v1145
    %v1147 = vsel %vm1031, %v804, 0.0
    %v1148 = vadd.f32 %v1146, %v1147
    %v1149 = vsel %vm1031, %v932, 0.0
    %v1150 = vadd.f32 %v1148, %v1149
    %v1151 = vsel %vm1031, %v805, 0.0
    %v1152 = vadd.f32 %v1150, %v1151
    %v1153 = vsel %vm1031, %v933, 0.0
    %v1154 = vadd.f32 %v1152, %v1153
    %v1155 = vsel %vm1031, %v806, 0.0
    %v1156 = vadd.f32 %v1154, %v1155
    %v1157 = vsel %vm1031, %v934, 0.0
    %v1158 = vadd.f32 %v1156, %v1157
    %v1159 = vsel %vm1031, %v807, 0.0
    %v1160 = vadd.f32 %v1158, %v1159
    %v1161 = vsel %vm1031, %v935, 0.0
    %v1162 = vadd.f32 %v1160, %v1161
    %v1163 = vsel %vm1031, %v808, 0.0
    %v1164 = vadd.f32 %v1162, %v1163
    %v1165 = vsel %vm1031, %v936, 0.0
    %v1166 = vadd.f32 %v1164, %v1165
    %v1167 = vsel %vm1031, %v809, 0.0
    %v1168 = vadd.f32 %v1166, %v1167
    %v1169 = vsel %vm1031, %v937, 0.0
    %v1170 = vadd.f32 %v1168, %v1169
    %v1171 = vsel %vm1031, %v810, 0.0
    %v1172 = vadd.f32 %v1170, %v1171
    %v1173 = vsel %vm1031, %v938, 0.0
    %v1174 = vadd.f32 %v1172, %v1173
    %v1175 = vsel %vm1031, %v811, 0.0
    %v1176 = vadd.f32 %v1174, %v1175
    %v1177 = vsel %vm1031, %v939, 0.0
    %v1178 = vadd.f32 %v1176, %v1177
    %v1179 = vsel %vm1031, %v812, 0.0
    %v1180 = vadd.f32 %v1178, %v1179
    %v1181 = vsel %vm1031, %v940, 0.0
    %v1182 = vadd.f32 %v1180, %v1181
    %v1183 = vsel %vm1031, %v813, 0.0
    %v1184 = vadd.f32 %v1182, %v1183
    %v1185 = vsel %vm1031, %v941, 0.0
    %v1186 = vadd.f32 %v1184, %v1185
    %v1187 = vsel %vm1031, %v814, 0.0
    %v1188 = vadd.f32 %v1186, %v1187
    %v1189 = vsel %vm1031, %v942, 0.0
    %v1190 = vadd.f32 %v1188, %v1189
    %v1191 = vsel %vm1031, %v815, 0.0
    %v1192 = vadd.f32 %v1190, %v1191
    %v1193 = vsel %vm1031, %v943, 0.0
    %v1194 = vadd.f32 %v1192, %v1193
    %v1195 = vsel %vm1031, %v816, 0.0
    %v1196 = vadd.f32 %v1194, %v1195
    %v1197 = vsel %vm1031, %v944, 0.0
    %v1198 = vadd.f32 %v1196, %v1197
    %v1199 = vsel %vm1031, %v817, 0.0
    %v1200 = vadd.f32 %v1198, %v1199
    %v1201 = vsel %vm1031, %v945, 0.0
    %v1202 = vadd.f32 %v1200, %v1201
    %v1203 = vsel %vm1031, %v818, 0.0
    %v1204 = vadd.f32 %v1202, %v1203
    %v1205 = vsel %vm1031, %v946, 0.0
    %v1206 = vadd.f32 %v1204, %v1205
    %v1207 = vsel %vm1031, %v819, 0.0
    %v1208 = vadd.f32 %v1206, %v1207
    %v1209 = vsel %vm1031, %v947, 0.0
    %v1210 = vadd.f32 %v1208, %v1209
    %v1211 = vsel %vm1031, %v820, 0.0
    %v1212 = vadd.f32 %v1210, %v1211
    %v1213 = vsel %vm1031, %v948, 0.0
    %v1214 = vadd.f32 %v1212, %v1213
    %v1215 = vsel %vm1031, %v821, 0.0
    %v1216 = vadd.f32 %v1214, %v1215
    %v1217 = vsel %vm1031, %v949, 0.0
    %v1218 = vadd.f32 %v1216, %v1217
    %v1219 = vsel %vm1031, %v822, 0.0
    %v1220 = vadd.f32 %v1218, %v1219
    %v1221 = vsel %vm1031, %v950, 0.0
    %v1222 = vadd.f32 %v1220, %v1221
    %v1223 = vsel %vm1031, %v823, 0.0
    %v1224 = vadd.f32 %v1222, %v1223
    %v1225 = vsel %vm1031, %v951, 0.0
    %v1226 = vadd.f32 %v1224, %v1225
    %v1227 = vsel %vm1031, %v824, 0.0
    %v1228 = vadd.f32 %v1226, %v1227
    %v1229 = vsel %vm1031, %v952, 0.0
    %v1230 = vadd.f32 %v1228, %v1229
    %v1231 = vsel %vm1031, %v825, 0.0
    %v1232 = vadd.f32 %v1230, %v1231
    %v1233 = vsel %vm1031, %v953, 0.0
    %v1234 = vadd.f32 %v1232, %v1233
    %v1235 = vsel %vm1031, %v826, 0.0
    %v1236 = vadd.f32 %v1234, %v1235
    %v1237 = vsel %vm1031, %v954, 0.0
    %v1238 = vadd.f32 %v1236, %v1237
    %v1239 = vsel %vm1031, %v827, 0.0
    %v1240 = vadd.f32 %v1238, %v1239
    %v1241 = vsel %vm1031, %v955, 0.0
    %v1242 = vadd.f32 %v1240, %v1241
    %v1243 = vsel %vm1031, %v828, 0.0
    %v1244 = vadd.f32 %v1242, %v1243
    %v1245 = vsel %vm1031, %v956, 0.0
    %v1246 = vadd.f32 %v1244, %v1245
    %v1247 = vsel %vm1031, %v829, 0.0
    %v1248 = vadd.f32 %v1246, %v1247
    %v1249 = vsel %vm1031, %v957, 0.0
    %v1250 = vadd.f32 %v1248, %v1249
    %v1251 = vsel %vm1031, %v830, 0.0
    %v1252 = vadd.f32 %v1250, %v1251
    %v1253 = vsel %vm1031, %v958, 0.0
    %v1254 = vadd.f32 %v1252, %v1253
    %v1255 = vsel %vm1031, %v831, 0.0
    %v1256 = vadd.f32 %v1254, %v1255
    %v1257 = vsel %vm1031, %v959, 0.0
    %v1258 = vadd.f32 %v1256, %v1257
    %v1259 = vsel %vm1031, %v832, 0.0
    %v1260 = vadd.f32 %v1258, %v1259
    %v1261 = vsel %vm1031, %v960, 0.0
    %v1262 = vadd.f32 %v1260, %v1261
    %v1263 = vsel %vm1031, %v833, 0.0
    %v1264 = vadd.f32 %v1262, %v1263
    %v1265 = vsel %vm1031, %v961, 0.0
    %v1266 = vadd.f32 %v1264, %v1265
    %v1267 = vsel %vm1031, %v834, 0.0
    %v1268 = vadd.f32 %v1266, %v1267
    %v1269 = vsel %vm1031, %v962, 0.0
    %v1270 = vadd.f32 %v1268, %v1269
    %v1271 = vsel %vm1031, %v835, 0.0
    %v1272 = vadd.f32 %v1270, %v1271
    %v1273 = vsel %vm1031, %v963, 0.0
    %v1274 = vadd.f32 %v1272, %v1273
    %v1275 = vsel %vm1031, %v836, 0.0
    %v1276 = vadd.f32 %v1274, %v1275
    %v1277 = vsel %vm1031, %v964, 0.0
    %v1278 = vadd.f32 %v1276, %v1277
    %v1279 = vsel %vm1031, %v837, 0.0
    %v1280 = vadd.f32 %v1278, %v1279
    %v1281 = vsel %vm1031, %v965, 0.0
    %v1282 = vadd.f32 %v1280, %v1281
    %v1283 = vsel %vm1031, %v838, 0.0
    %v1284 = vadd.f32 %v1282, %v1283
    %v1285 = vsel %vm1031, %v966, 0.0
    %v1286 = vadd.f32 %v1284, %v1285
    %1287 = vadd.xlane.f32.xlu0 %v1286
    %v1288 = vpop.xlane.xlu0 %1287
    %s1289 = sld [smem:[#allocation2]]
    %v1290 = vstv %s1289
    %v1291 = vadd.f32 %v1288, %v1290
    %v1292 = vxor.u32 %v1291, 2147483648
    %v1293 = vmul.f32 %v1292, 1.442695
    %v1294 = vpow.pop %v1293
    %v1295 = vadd.f32 %v1294, 1.0
    %v1296 = vrcp.pop %v1295
    %v1297 = vmul.f32 1.0, %v1296
    %vm1298 = vcmask 3072
    %1299 = vst.msk [vmem:[%s3] sm:$0xf] %vm1298, %v1297
    // Predicated region
    $region22: #{tgcn_forward.1} parent=1 // pred_check
      _
    $region23: #{tgcn_forward.1} parent=1 // pred_check_branch
      %1301 = sbr.rel (0) target = $region25
    $region24: #{tgcn_forward.1} parent=1 // pred_region
      _
    $region25: #{tgcn_forward.1} parent=1 // pred_fallthru
      _
    // Predicated region
    $region26: #{tgcn_forward.1} parent=1 // pred_check
      _
    $region27: #{tgcn_forward.1} parent=1 // pred_check_branch
      %1303 = sbr.rel (0) target = $region29
    $region28: #{tgcn_forward.1} parent=1 // pred_region
      _
    $region29: #{tgcn_forward.1} parent=1 // pred_fallthru
      _
    %1304 = vsyncpa [#allocation4], 1
    %1305 = vsyncpa [#allocation6], 1

</llo_original>
